<compile_context>
chip_gen: v7x
topology: tpu7x:2x2x1
jax: 0.10.0
libtpu: 0.0.40
codegen_flags: <defaults>
</compile_context>

<pallas_src>
import math
from functools import partial

import jax
import jax.numpy as jnp
from jax import lax
from jax.experimental import pallas as pl
from jax.experimental.pallas import tpu as pltpu


def _round_up(x: int, m: int) -> int:
    return ((x + m - 1) // m) * m


def _mha_kernel(x_ref, w_in_ref, b_in_ref, w_out_ref, b_out_ref, o_ref, *,
                batch_block: int, seq_len: int, embed_dim: int,
                num_heads: int, head_dim: int, head_pad: int, embed_pad: int):
    """Multi-head self-attention for one block of `batch_block` batch elements.

    x_ref     : (B, L, E)        VMEM, f32
    w_in_ref  : (E, 3*H*hdp)     VMEM, bf16 (q/k/v proj, transposed, per-head padded,
                                             q block pre-scaled by 1/sqrt(hd))
    b_in_ref  : (1, 3*H*hdp)     VMEM, f32
    w_out_ref : (H*hdp, Ep)      VMEM, bf16 (out_proj.weight^T, per-head padded rows)
    b_out_ref : (1, Ep)          VMEM, f32
    o_ref     : (B, L, Ep)       VMEM  (lane-dense output; wrapper drops padding)
    """
    B, L, E, H = batch_block, seq_len, embed_dim, num_heads
    hdp, Ep = head_pad, embed_pad
    R = B * L

    # Fused QKV in-projection over the whole batch block: (B*L, E) @ (E, 3*H*hdp)
    # with bf16 operands on the MXU and f32 accumulation.  The 1/sqrt(hd) scale
    # is already folded into the q columns of w_in / b_in.
    x = x_ref[...].reshape(R, E).astype(jnp.bfloat16)
    qkv = jnp.dot(x, w_in_ref[...], preferred_element_type=jnp.float32)
    qkv = qkv + b_in_ref[...]                                     # (R, 3*H*hdp) f32

    dim_qk = (((2,), (2,)), ((0,), (0,)))   # contract head dim, batch over B
    dim_pv = (((2,), (1,)), ((0,), (0,)))   # contract key dim,  batch over B

    out = None
    for h in range(H):
        # Per-head slices start at multiples of 128 lanes (heads are padded to
        # hdp on the weight side) -> no relayout; the padded columns are exact
        # zeros and contribute nothing to scores, context or the projection.
        q = qkv[:, (0 * H + h) * hdp:(0 * H + h + 1) * hdp].reshape(B, L, hdp)
        k = qkv[:, (1 * H + h) * hdp:(1 * H + h + 1) * hdp].reshape(B, L, hdp)
        v = qkv[:, (2 * H + h) * hdp:(2 * H + h + 1) * hdp].reshape(B, L, hdp)

        s = lax.dot_general(q.astype(jnp.bfloat16), k.astype(jnp.bfloat16),
                            dim_qk, preferred_element_type=jnp.float32)   # (B, L, L)
        # Softmax in f32; denominator reciprocal on the EUP.
        m = jnp.max(s, axis=-1, keepdims=True)
        p = jnp.exp(s - m)
        p = p * pl.reciprocal(jnp.sum(p, axis=-1, keepdims=True), approx=True)

        ctx = lax.dot_general(p.astype(jnp.bfloat16), v.astype(jnp.bfloat16),
                              dim_pv, preferred_element_type=jnp.float32)  # (B, L, hdp)

        # Per-head slab of the (head-padded) out-projection weight; heads are
        # combined by summation of partial projections (no concatenation).
        w_o_h = w_out_ref[pl.ds(h * hdp, hdp), :]                          # (hdp, Ep) bf16
        part = jnp.dot(ctx.reshape(R, hdp).astype(jnp.bfloat16), w_o_h,
                       preferred_element_type=jnp.float32)                 # (R, Ep)
        out = part if out is None else out + part

    out = out + b_out_ref[...]
    o_ref[...] = out.reshape(B, L, Ep).astype(o_ref.dtype)


def prepare_attention_params(params, *, num_heads: int):
    """One-time weight preprocessing: transpose, per-head lane pad, fold the
    1/sqrt(hd) scale into the q projection, cast matmul operands to bf16."""
    w_in = jnp.asarray(params["in_proj_weight"], jnp.float32)    # (3E, E)
    b_in = jnp.asarray(params["in_proj_bias"], jnp.float32)      # (3E,)
    w_out = jnp.asarray(params["out_proj_weight"], jnp.float32)  # (E, E)
    b_out = jnp.asarray(params["out_proj_bias"], jnp.float32)    # (E,)

    E = w_in.shape[1]
    H = num_heads
    assert H >= 1 and E % H == 0
    hd = E // H
    hdp = _round_up(hd, 128)
    Ep = _round_up(E, 128)
    scale = 1.0 / math.sqrt(hd)

    def prep_w(w, s):
        # w: (E, E) rows = output features (head-major), cols = input features.
        wt = (w * s).T.reshape(E, H, hd)                         # (E_in, H, hd)
        wt = jnp.pad(wt, ((0, 0), (0, 0), (0, hdp - hd)))
        return wt.reshape(E, H * hdp)

    def prep_b(b, s):
        bp = jnp.pad((b * s).reshape(H, hd), ((0, 0), (0, hdp - hd)))
        return bp.reshape(H * hdp)

    w_q, w_k, w_v = w_in[0:E], w_in[E:2 * E], w_in[2 * E:3 * E]
    b_q, b_k, b_v = b_in[0:E], b_in[E:2 * E], b_in[2 * E:3 * E]

    w_in_t = jnp.concatenate(
        [prep_w(w_q, scale), prep_w(w_k, 1.0), prep_w(w_v, 1.0)],
        axis=1).astype(jnp.bfloat16)                             # (E, 3*H*hdp)
    b_in_p = jnp.concatenate(
        [prep_b(b_q, scale), prep_b(b_k, 1.0), prep_b(b_v, 1.0)])[None, :]  # (1, 3*H*hdp) f32

    w_out_p = jnp.pad(w_out.T.reshape(H, hd, E),
                      ((0, 0), (0, hdp - hd), (0, Ep - E)))
    w_out_p = w_out_p.reshape(H * hdp, Ep).astype(jnp.bfloat16)  # (H*hdp, Ep)
    b_out_p = jnp.pad(b_out, (0, Ep - E))[None, :]               # (1, Ep) f32

    return {
        "w_in": w_in_t, "b_in": b_in_p, "w_out": w_out_p, "b_out": b_out_p,
        "embed_dim": E, "num_heads": H, "head_dim": hd,
        "head_pad": hdp, "embed_pad": Ep,
    }


def multihead_self_attention(x_lne, prepped, *, target_rows: int = 512):
    """x_lne: (L, N, E) float32, PyTorch nn.MultiheadAttention layout."""
    L, N, E = x_lne.shape
    assert E == prepped["embed_dim"]
    H = prepped["num_heads"]
    hd, hdp, Ep = prepped["head_dim"], prepped["head_pad"], prepped["embed_pad"]
    Hp = H * hdp

    # Batch elements per grid step: fill the MXU M dimension (~target_rows rows
    # in the fused in-projection), pad N up to a multiple of B with zero rows
    # (no divisor search), and keep >= 2 grid steps when the batch allows it
    # so both v7x TensorCores get work via the "parallel" grid axis.
    b_target = max(1, -(-target_rows // L))
    b_cap = max(1, -(-N // 2))
    B = max(1, min(b_target, b_cap))
    N_pad = _round_up(N, B)
    grid = N_pad // B

    # (L, N, E) -> (N_pad, L, E): the grid blocks over batch; padded rows are
    # zero and are dropped after the call.
    # TODO(synk): block directly on (L, N, E) to drop these two HBM transposes.
    x_nle = jnp.transpose(x_lne, (1, 0, 2))
    if N_pad > N:
        x_nle = jnp.pad(x_nle, ((0, N_pad - N), (0, 0), (0, 0)))

    kernel = partial(_mha_kernel, batch_block=B, seq_len=L, embed_dim=E,
                     num_heads=H, head_dim=hd, head_pad=hdp, embed_pad=Ep)

    # VMEM budget: double-buffered activation blocks + single-buffered weights
    # + headroom for in-kernel intermediates (qkv, scores, out accumulators).
    R = B * L
    x_blk = B * L * E * 4
    o_blk = B * L * Ep * 4
    w_bytes = (E * 3 * Hp + Hp * Ep) * 2 + (3 * Hp + Ep) * 4
    interm = R * 3 * Hp * 4 + 2 * B * L * L * 4 + 2 * R * Ep * 4
    vmem_limit = int(min(max(2 * (2 * (x_blk + o_blk) + 2 * w_bytes + interm),
                             32 * 1024 * 1024), 64 * 1024 * 1024))

    flops = (2 * N_pad * L * E * 3 * Hp          # QKV in-projection
             + 4 * N_pad * H * L * L * hdp       # scores + PV
             + 2 * N_pad * L * Hp * Ep)          # out-projection
    cost = pl.CostEstimate(
        flops=int(flops),
        transcendentals=int(N_pad * H * L * L),
        bytes_accessed=int(N_pad * L * (E + Ep) * 4
                           + (E * 3 * Hp + Hp * Ep) * 2 + (3 * Hp + Ep) * 4))

    out_pad = pl.pallas_call(
        kernel,
        out_shape=jax.ShapeDtypeStruct((N_pad, L, Ep), x_lne.dtype),
        grid_spec=pltpu.PrefetchScalarGridSpec(
            num_scalar_prefetch=0,
            grid=(grid,),
            in_specs=[
                pl.BlockSpec((B, L, E), lambda i: (i, 0, 0)),
                # Grid-constant weight blocks: single-buffer to halve their
                # VMEM footprint (matters on v7x's 64 MiB VMEM per TC).
                pl.BlockSpec((E, 3 * Hp), lambda i: (0, 0),
                             pipeline_mode=pl.Buffered(1)),
                pl.BlockSpec((1, 3 * Hp), lambda i: (0, 0),
                             pipeline_mode=pl.Buffered(1)),
                pl.BlockSpec((Hp, Ep), lambda i: (0, 0),
                             pipeline_mode=pl.Buffered(1)),
                pl.BlockSpec((1, Ep), lambda i: (0, 0),
                             pipeline_mode=pl.Buffered(1)),
            ],
            out_specs=pl.BlockSpec((B, L, Ep), lambda i: (i, 0, 0)),
        ),
        compiler_params=pltpu.CompilerParams(
            dimension_semantics=("parallel",),
            vmem_limit_bytes=vmem_limit),
        cost_estimate=cost,
    )(x_nle, prepped["w_in"], prepped["b_in"], prepped["w_out"], prepped["b_out"])

    # Drop batch / lane padding and return to PyTorch's (L, N, E) layout.
    return jnp.transpose(out_pad[:N, :, :E], (1, 0, 2))


def my_encoder_pooler_attention_forward(x_lne, prepped):
    """Mirrors MyEncoderPooler_attention.forward: (concepts, None, input, None)."""
    concepts = multihead_self_attention(x_lne, prepped)
    return (concepts, None, x_lne, None)


def _reference_mha(x_lne, params, *, num_heads: int):
    """Pure-JAX reference matching torch.nn.MultiheadAttention (no dropout, no mask)."""
    L, N, E = x_lne.shape
    hd = E // num_heads
    w_in = params["in_proj_weight"]    # (3E, E)
    b_in = params["in_proj_bias"]      # (3E,)
    w_out = params["out_proj_weight"]  # (E, E)
    b_out = params["out_proj_bias"]    # (E,)

    qkv = jnp.einsum("lne,fe->lnf", x_lne, w_in) + b_in  # (L, N, 3E)
    q, k, v = jnp.split(qkv, 3, axis=-1)

    def split_heads(t):  # (L, N, E) -> (N, H, L, hd)
        return jnp.transpose(t.reshape(L, N, num_heads, hd), (1, 2, 0, 3))

    qh, kh, vh = split_heads(q), split_heads(k), split_heads(v)
    s = jnp.einsum("nhld,nhmd->nhlm", qh, kh) / math.sqrt(hd)
    p = jax.nn.softmax(s, axis=-1)
    o = jnp.einsum("nhlm,nhmd->nhld", p, vh)              # (N, H, L, hd)
    o = jnp.transpose(o, (2, 0, 1, 3)).reshape(L, N, E)   # (L, N, E)
    return jnp.einsum("lne,fe->lnf", o, w_out) + b_out


if __name__ == "__main__":
    # Module config: nn.MultiheadAttention(output_dim, output_dim // 64)
    # -> choose output_dim = 64 so num_heads = 1 (the default output_dim=32
    #    gives 0 heads, which PyTorch itself would reject).
    E = 64
    H = E // 64
    L = 8   # seq_len
    N = 2   # batch

    key = jax.random.PRNGKey(0)
    k_x, k_w_in, k_b_in, k_w_out, k_b_out = jax.random.split(key, 5)

    x = jax.random.normal(k_x, (L, N, E), dtype=jnp.float32)
    params = {
        "in_proj_weight": jax.random.normal(k_w_in, (3 * E, E), dtype=jnp.float32) * 0.05,
        "in_proj_bias": jax.random.normal(k_b_in, (3 * E,), dtype=jnp.float32) * 0.02,
        "out_proj_weight": jax.random.normal(k_w_out, (E, E), dtype=jnp.float32) * 0.05,
        "out_proj_bias": jax.random.normal(k_b_out, (E,), dtype=jnp.float32) * 0.02,
    }

    # One-time weight prep (hoisted out of the per-call hot path).
    prepped = prepare_attention_params(params, num_heads=H)

    concepts, _none1, passthrough, _none2 = my_encoder_pooler_attention_forward(
        x, prepped)
    concepts = jax.block_until_ready(concepts)

    ref = _reference_mha(x, params, num_heads=H)
    assert concepts.shape == (L, N, E)
    assert passthrough.shape == x.shape
    # bf16 MXU operands + approx reciprocal in the softmax denominator ->
    # relaxed tolerance (structural bugs would be ~the output scale, >> 1e-2).
    assert jnp.allclose(concepts, ref, atol=1e-2, rtol=1e-2), \
        "Pallas output mismatch vs reference"

    print("KERNEL_OK")
</pallas_src>

<mosaic_0001>
module attributes {stable_mosaic.version = 11 : i64} {
  func.func @_mha_kernel(%arg0: i32, %arg1: memref<1x8x64xf32, #tpu.memory_space<vmem>>, %arg2: memref<64x384xbf16, #tpu.memory_space<vmem>>, %arg3: memref<1x384xf32, #tpu.memory_space<vmem>>, %arg4: memref<128x128xbf16, #tpu.memory_space<vmem>>, %arg5: memref<1x128xf32, #tpu.memory_space<vmem>>, %arg6: memref<1x8x128xf32, #tpu.memory_space<vmem>>) attributes {dimension_semantics = [#tpu.dimension_semantics<parallel>], iteration_bounds = array<i64: 2>, scalar_prefetch = 0 : i64, scratch_operands = 0 : i64, tpu.core_type = #tpu.core_type<tc>, window_params = [{transform_indices = @transform_0, window_bounds = array<i64: 1, 8, 64>}, {pipeline_mode = #tpu.pipeline_mode<synchronous>, transform_indices = @transform_1, window_bounds = array<i64: 64, 384>}, {pipeline_mode = #tpu.pipeline_mode<synchronous>, transform_indices = @transform_2, window_bounds = array<i64: 1, 384>}, {pipeline_mode = #tpu.pipeline_mode<synchronous>, transform_indices = @transform_3, window_bounds = array<i64: 128, 128>}, {pipeline_mode = #tpu.pipeline_mode<synchronous>, transform_indices = @transform_4, window_bounds = array<i64: 1, 128>}, {transform_indices = @transform_5, window_bounds = array<i64: 1, 8, 128>}]} {
    %c0 = arith.constant 0 : index
    %c0_0 = arith.constant 0 : index
    %c0_1 = arith.constant 0 : index
    %0 = vector.load %arg1[%c0, %c0_0, %c0_1] : memref<1x8x64xf32, #tpu.memory_space<vmem>>, vector<1x8x64xf32>
    %1 = vector.shape_cast %0 : vector<1x8x64xf32> to vector<8x64xf32>
    %2 = arith.truncf %1 : vector<8x64xf32> to vector<8x64xbf16>
    %c0_2 = arith.constant 0 : index
    %c0_3 = arith.constant 0 : index
    %3 = vector.load %arg2[%c0_2, %c0_3] : memref<64x384xbf16, #tpu.memory_space<vmem>>, vector<64x384xbf16>
    %cst = arith.constant dense<0.000000e+00> : vector<8x384xf32>
    %4 = tpu.matmul %2, %3, %cst {dimension_numbers = #tpu.dot_dimension_numbers<[1], [0], [0], [1], [0, 0, 1, 1], [], []>} : vector<8x64xbf16>, vector<64x384xbf16>, vector<8x384xf32> -> vector<8x384xf32>
    %c0_4 = arith.constant 0 : index
    %c0_5 = arith.constant 0 : index
    %5 = vector.load %arg3[%c0_4, %c0_5] : memref<1x384xf32, #tpu.memory_space<vmem>>, vector<1x384xf32>
    %6 = vector.broadcast %5 : vector<1x384xf32> to vector<8x384xf32>
    %7 = arith.addf %4, %6 : vector<8x384xf32>
    %8 = vector.extract_strided_slice %7 {offsets = [0, 0], sizes = [8, 128], strides = [1, 1]} : vector<8x384xf32> to vector<8x128xf32>
    %9 = vector.shape_cast %8 : vector<8x128xf32> to vector<1x8x128xf32>
    %10 = vector.extract_strided_slice %7 {offsets = [0, 128], sizes = [8, 128], strides = [1, 1]} : vector<8x384xf32> to vector<8x128xf32>
    %11 = vector.shape_cast %10 : vector<8x128xf32> to vector<1x8x128xf32>
    %12 = vector.extract_strided_slice %7 {offsets = [0, 256], sizes = [8, 128], strides = [1, 1]} : vector<8x384xf32> to vector<8x128xf32>
    %13 = vector.shape_cast %12 : vector<8x128xf32> to vector<1x8x128xf32>
    %14 = arith.truncf %9 : vector<1x8x128xf32> to vector<1x8x128xbf16>
    %15 = arith.truncf %11 : vector<1x8x128xf32> to vector<1x8x128xbf16>
    %cst_6 = arith.constant dense<0.000000e+00> : vector<1x8x8xf32>
    %16 = tpu.matmul %14, %15, %cst_6 {dimension_numbers = #tpu.dot_dimension_numbers<[2], [2], [1], [1], [0, 0, 0, 1, 1, 1], [0], [0]>} : vector<1x8x128xbf16>, vector<1x8x128xbf16>, vector<1x8x8xf32> -> vector<1x8x8xf32>
    %cst_7 = arith.constant dense<0xFF800000> : vector<1x8xf32>
    %17 = vector.multi_reduction <maximumf>, %16, %cst_7 [2] : vector<1x8x8xf32> to vector<1x8xf32>
    %18 = vector.shape_cast %17 : vector<1x8xf32> to vector<1x8x1xf32>
    %19 = vector.broadcast %18 : vector<1x8x1xf32> to vector<1x8x8xf32>
    %20 = arith.subf %16, %19 : vector<1x8x8xf32>
    %21 = math.exp %20 : vector<1x8x8xf32>
    %cst_8 = arith.constant dense<0.000000e+00> : vector<1x8xf32>
    %22 = vector.multi_reduction <add>, %21, %cst_8 [2] : vector<1x8x8xf32> to vector<1x8xf32>
    %23 = vector.shape_cast %22 : vector<1x8xf32> to vector<1x8x1xf32>
    %24 = tpu.reciprocal %23 {approx = true} : vector<1x8x1xf32> -> vector<1x8x1xf32>
    %25 = vector.broadcast %24 : vector<1x8x1xf32> to vector<1x8x8xf32>
    %26 = arith.mulf %21, %25 : vector<1x8x8xf32>
    %27 = arith.truncf %26 : vector<1x8x8xf32> to vector<1x8x8xbf16>
    %28 = arith.truncf %13 : vector<1x8x128xf32> to vector<1x8x128xbf16>
    %cst_9 = arith.constant dense<0.000000e+00> : vector<1x8x128xf32>
    %29 = tpu.matmul %27, %28, %cst_9 {dimension_numbers = #tpu.dot_dimension_numbers<[2], [1], [1], [2], [0, 0, 0, 1, 1, 2], [0], [0]>} : vector<1x8x8xbf16>, vector<1x8x128xbf16>, vector<1x8x128xf32> -> vector<1x8x128xf32>
    %c0_10 = arith.constant 0 : index
    %c0_11 = arith.constant 0 : index
    %30 = vector.load %arg4[%c0_10, %c0_11] : memref<128x128xbf16, #tpu.memory_space<vmem>>, vector<128x128xbf16>
    %31 = vector.shape_cast %29 : vector<1x8x128xf32> to vector<8x128xf32>
    %32 = arith.truncf %31 : vector<8x128xf32> to vector<8x128xbf16>
    %cst_12 = arith.constant dense<0.000000e+00> : vector<8x128xf32>
    %33 = tpu.matmul %32, %30, %cst_12 {dimension_numbers = #tpu.dot_dimension_numbers<[1], [0], [0], [1], [0, 0, 1, 1], [], []>} : vector<8x128xbf16>, vector<128x128xbf16>, vector<8x128xf32> -> vector<8x128xf32>
    %c0_13 = arith.constant 0 : index
    %c0_14 = arith.constant 0 : index
    %34 = vector.load %arg5[%c0_13, %c0_14] : memref<1x128xf32, #tpu.memory_space<vmem>>, vector<1x128xf32>
    %35 = vector.broadcast %34 : vector<1x128xf32> to vector<8x128xf32>
    %36 = arith.addf %33, %35 : vector<8x128xf32>
    %37 = vector.shape_cast %36 : vector<8x128xf32> to vector<1x8x128xf32>
    %c0_15 = arith.constant 0 : index
    %c0_16 = arith.constant 0 : index
    %c0_17 = arith.constant 0 : index
    %38 = vector.load %arg6[%c0_15, %c0_16, %c0_17] : memref<1x8x128xf32, #tpu.memory_space<vmem>>, vector<1x8x128xf32>
    tpu.vector_store %arg6[%c0_15, %c0_16, %c0_17], %37 {strides = array<i32>} : memref<1x8x128xf32, #tpu.memory_space<vmem>>, vector<1x8x128xf32>,
    return
  }
  func.func @transform_0(%arg0: i32) -> (i32, i32, i32) {
    %c0_i32 = arith.constant 0 : i32
    %c0_i32_0 = arith.constant 0 : i32
    %c0_i32_1 = arith.constant 0 : i32
    return %arg0, %c0_i32, %c0_i32_0 : i32, i32, i32
  }
  func.func @transform_1(%arg0: i32) -> (i32, i32) {
    %c0_i32 = arith.constant 0 : i32
    %c0_i32_0 = arith.constant 0 : i32
    %c0_i32_1 = arith.constant 0 : i32
    return %c0_i32, %c0_i32_0 : i32, i32
  }
  func.func @transform_2(%arg0: i32) -> (i32, i32) {
    %c0_i32 = arith.constant 0 : i32
    %c0_i32_0 = arith.constant 0 : i32
    %c0_i32_1 = arith.constant 0 : i32
    return %c0_i32, %c0_i32_0 : i32, i32
  }
  func.func @transform_3(%arg0: i32) -> (i32, i32) {
    %c0_i32 = arith.constant 0 : i32
    %c0_i32_0 = arith.constant 0 : i32
    %c0_i32_1 = arith.constant 0 : i32
    return %c0_i32, %c0_i32_0 : i32, i32
  }
  func.func @transform_4(%arg0: i32) -> (i32, i32) {
    %c0_i32 = arith.constant 0 : i32
    %c0_i32_0 = arith.constant 0 : i32
    %c0_i32_1 = arith.constant 0 : i32
    return %c0_i32, %c0_i32_0 : i32, i32
  }
  func.func @transform_5(%arg0: i32) -> (i32, i32, i32) {
    %c0_i32 = arith.constant 0 : i32
    %c0_i32_0 = arith.constant 0 : i32
    %c0_i32_1 = arith.constant 0 : i32
    return %arg0, %c0_i32, %c0_i32_0 : i32, i32, i32
  }
}

</mosaic_0001>

<llo_original>
// kernel: tpu_custom_call.1
$region0: #{tpu_custom_call.1}
  #allocation0 [shape = 'u32[]', space=smem, size = 0x4, offset = 0x4, fixed_abs, tag = 'smem constant byte address 0x4 - core index']
  #allocation1 [shape = 'u32[144,128]{1,0:T(1,128)}', space=vmem, size = 0x12000, scoped, tag = 'internal scratch']
  %s0 = inlined_call_operand.hbm [shape: f32[2,8,64], index: 0, kind: input, shape index: {}]
  %s1 = inlined_call_operand.hbm [shape: bf16[64,384], index: 1, kind: input, shape index: {}]
  %s2 = inlined_call_operand.vmem [shape: f32[1,384], index: 2, kind: input, shape index: {}]
  %s3 = inlined_call_operand.hbm [shape: bf16[128,128], index: 3, kind: input, shape index: {}]
  %s4 = inlined_call_operand.vmem [shape: f32[1,128], index: 4, kind: input, shape index: {}]
  %s5 = inlined_call_operand.hbm [shape: f32[2,8,128], index: 5, kind: output, shape index: {}]
  %s6 = sld [smem:[#allocation0]]
  $region65: #{tpu_custom_call.1} parent=0
    _
  %s8 = ssub.s32 1, %s6
  %s9 = scalar_select 0, %s8, %s6
  $region1: #{tpu_custom_call.1} parent=0
    #allocation2 [shape = 'u8[8192]{0}', space=vmem, size = 0x2000, scoped, tag = 'input window, operand 0']
    #allocation3 [shape = 's32[2]{0}', space=sflag, size = 0x8, scoped, tag = 'scoped memory for tpu_custom_call.1']
    #allocation4 [shape = 's32[2]{0}', space=sflag, size = 0x8, scoped, tag = 'scoped memory for tpu_custom_call.1']
    #allocation5 [shape = 'u8[49152]{0}', space=vmem, size = 0xc000, scoped, tag = 'input window, operand 1, single buffered']
    #allocation6 [shape = 's32[1]{0}', space=sflag, size = 0x4, scoped, tag = 'scoped memory for tpu_custom_call.1']
    #allocation7 [shape = 'u8[32768]{0}', space=vmem, size = 0x8000, scoped, tag = 'input window, operand 3, single buffered']
    #allocation8 [shape = 'u8[8192]{0}', space=vmem, size = 0x2000, scoped, tag = 'output window, operand 0']
    %10 = vsyncpa [#allocation3], 0
    %s11 = scalar_lea.sflag [#allocation3], 1
    %12 = vsyncpa %s11, 0
    %13 = vsyncpa [#allocation6], 0
    %14 = vsyncpa [#allocation4], 0
    %s15 = scalar_lea.sflag [#allocation4], 1
    %16 = vsyncpa %s15, 0
    loop: start=0, step=1, limit=4
    $region2: #{tpu_custom_call.1} parent=1 // loop_pre_header
      _
    $region3: #{tpu_custom_call.1} parent=1 // loop_header
      %s18 = sphi 0, %s22
      %p19 = scmp.ge.s32.totalorder %s18, 4
      %s28 = sphi 0, %s30
      %s31 = sphi 0, %s28
      %s32 = sphi 0, %s31
      %s48 = sphi 0, %s32
      %s52 = sphi 0, %s52
      %s54 = sphi 0, %s52
      %s55 = sphi 0, %s54
      %s69 = sphi 0, %s55
      %s73 = sphi 0, %s73
      %s75 = sphi 0, %s73
      %s76 = sphi 0, %s75
      %s90 = sphi 0, %s76
      %s94 = sphi 0, %s94
      %s96 = sphi 0, %s94
      %s97 = sphi 0, %s96
      %s111 = sphi 0, %s97
      %s115 = sphi 0, %s115
      %s117 = sphi 0, %s115
      %s118 = sphi 0, %s117
      %s132 = sphi 0, %s118
      %s138 = sphi 0, %s140
      %s141 = sphi 0, %s138
      %s142 = sphi 0, %s141
      %s158 = sphi 0, %s142
    $region4: #{tpu_custom_call.1} parent=1 // loop_header_branch
      %21 = sbr.rel (%p19) target = $region8
    $region5: #{tpu_custom_call.1} parent=1 // loop_body
      %s23 = ssub.s32 %s18, 1
      %s24 = ssub.s32 %s18, 2
      %s25 = sadd.s32 %s18, 1
      %s26 = ssub.s32 %s18, %s25
      %p27 = scmp.eq.s32.totalorder %s26, 0
      %s29 = sadd.s32 %s28, 1
      %s30 = scalar_select %p27, %s28, %s29
      %p33 = pneg %p27
      %p34 = scmp.eq.s32.totalorder %s18, 1
      %p35 = por %p33, %p34
      %p36 = scmp.ne.s32.totalorder %s28, %s31
      %p37 = scmp.eq.s32.totalorder %s18, 0
      %p38 = por %p36, %p37
      %p39 = scmp.ne.s32.totalorder %s28, %s31
      %p40 = scmp.eq.s32.totalorder %s23, 1
      %p41 = por %p39, %p40
      %p42 = scmp.ne.s32.totalorder %s31, %s32
      %p43 = scmp.eq.s32.totalorder %s23, 0
      %p44 = por %p42, %p43
      %p45 = scmp.ne.s32.totalorder %s31, %s32
      %p46 = scmp.eq.s32.totalorder %s24, 1
      %p47 = por %p45, %p46
      %p49 = scmp.ne.s32.totalorder %s32, %s48
      %p50 = scmp.eq.s32.totalorder %s24, 0
      %p51 = por %p49, %p50
      %s53 = sadd.s32 %s52, 1
      %p56 = scmp.eq.s32.totalorder %s18, 1
      %p57 = scmp.ne.s32.totalorder %s52, %s54
      %p58 = scmp.eq.s32.totalorder %s18, 0
      %p59 = por %p57, %p58
      %p60 = scmp.ne.s32.totalorder %s52, %s54
      %p61 = scmp.eq.s32.totalorder %s23, 1
      %p62 = por %p60, %p61
      %p63 = scmp.ne.s32.totalorder %s54, %s55
      %p64 = scmp.eq.s32.totalorder %s23, 0
      %p65 = por %p63, %p64
      %p66 = scmp.ne.s32.totalorder %s54, %s55
      %p67 = scmp.eq.s32.totalorder %s24, 1
      %p68 = por %p66, %p67
      %p70 = scmp.ne.s32.totalorder %s55, %s69
      %p71 = scmp.eq.s32.totalorder %s24, 0
      %p72 = por %p70, %p71
      %s74 = sadd.s32 %s73, 1
      %p77 = scmp.eq.s32.totalorder %s18, 1
      %p78 = scmp.ne.s32.totalorder %s73, %s75
      %p79 = scmp.eq.s32.totalorder %s18, 0
      %p80 = por %p78, %p79
      %p81 = scmp.ne.s32.totalorder %s73, %s75
      %p82 = scmp.eq.s32.totalorder %s23, 1
      %p83 = por %p81, %p82
      %p84 = scmp.ne.s32.totalorder %s75, %s76
      %p85 = scmp.eq.s32.totalorder %s23, 0
      %p86 = por %p84, %p85
      %p87 = scmp.ne.s32.totalorder %s75, %s76
      %p88 = scmp.eq.s32.totalorder %s24, 1
      %p89 = por %p87, %p88
      %p91 = scmp.ne.s32.totalorder %s76, %s90
      %p92 = scmp.eq.s32.totalorder %s24, 0
      %p93 = por %p91, %p92
      %s95 = sadd.s32 %s94, 1
      %p98 = scmp.eq.s32.totalorder %s18, 1
      %p99 = scmp.ne.s32.totalorder %s94, %s96
      %p100 = scmp.eq.s32.totalorder %s18, 0
      %p101 = por %p99, %p100
      %p102 = scmp.ne.s32.totalorder %s94, %s96
      %p103 = scmp.eq.s32.totalorder %s23, 1
      %p104 = por %p102, %p103
      %p105 = scmp.ne.s32.totalorder %s96, %s97
      %p106 = scmp.eq.s32.totalorder %s23, 0
      %p107 = por %p105, %p106
      %p108 = scmp.ne.s32.totalorder %s96, %s97
      %p109 = scmp.eq.s32.totalorder %s24, 1
      %p110 = por %p108, %p109
      %p112 = scmp.ne.s32.totalorder %s97, %s111
      %p113 = scmp.eq.s32.totalorder %s24, 0
      %p114 = por %p112, %p113
      %s116 = sadd.s32 %s115, 1
      %p119 = scmp.eq.s32.totalorder %s18, 1
      %p120 = scmp.ne.s32.totalorder %s115, %s117
      %p121 = scmp.eq.s32.totalorder %s18, 0
      %p122 = por %p120, %p121
      %p123 = scmp.ne.s32.totalorder %s115, %s117
      %p124 = scmp.eq.s32.totalorder %s23, 1
      %p125 = por %p123, %p124
      %p126 = scmp.ne.s32.totalorder %s117, %s118
      %p127 = scmp.eq.s32.totalorder %s23, 0
      %p128 = por %p126, %p127
      %p129 = scmp.ne.s32.totalorder %s117, %s118
      %p130 = scmp.eq.s32.totalorder %s24, 1
      %p131 = por %p129, %p130
      %p133 = scmp.ne.s32.totalorder %s118, %s132
      %p134 = scmp.eq.s32.totalorder %s24, 0
      %p135 = por %p133, %p134
      %s136 = ssub.s32 %s18, %s25
      %p137 = scmp.eq.s32.totalorder %s136, 0
      %s139 = sadd.s32 %s138, 1
      %s140 = scalar_select %p137, %s138, %s139
      %p143 = pneg %p137
      %p144 = scmp.eq.s32.totalorder %s18, 1
      %p145 = por %p143, %p144
      %p146 = scmp.ne.s32.totalorder %s138, %s141
      %p147 = scmp.eq.s32.totalorder %s18, 0
      %p148 = por %p146, %p147
      %p149 = scmp.ne.s32.totalorder %s138, %s141
      %p150 = scmp.eq.s32.totalorder %s23, 1
      %p151 = por %p149, %p150
      %p152 = scmp.ne.s32.totalorder %s141, %s142
      %p153 = scmp.eq.s32.totalorder %s23, 0
      %p154 = por %p152, %p153
      %p155 = scmp.ne.s32.totalorder %s141, %s142
      %p156 = scmp.eq.s32.totalorder %s24, 1
      %p157 = por %p155, %p156
      %p159 = scmp.ne.s32.totalorder %s142, %s158
      %p160 = scmp.eq.s32.totalorder %s24, 0
      %p161 = por %p159, %p160
      %p162 = scmp.le.s32.totalorder 1, %s18
      %p163 = scmp.lt.s32.totalorder %s18, 3
      %p164 = pnand %p162, %p163
      %p165 = pneg %p164
      // Predicated region
      $region9: #{tpu_custom_call.1} parent=5 // pred_check
        _
      $region10: #{tpu_custom_call.1} parent=5 // pred_check_branch
        %167 = sbr.rel (%p164) target = $region12
      $region11: #{tpu_custom_call.1} parent=5 // pred_region
        %s168 = ssub.s32 %s18, 1
        // Predicated region
        $region13: #{tpu_custom_call.1} parent=11 // pred_check
          %p169 = pneg %p65
        $region14: #{tpu_custom_call.1} parent=11 // pred_check_branch
          %171 = sbr.rel (%p169) target = $region16
        $region15: #{tpu_custom_call.1} parent=11 // pred_region
          %s173 = ssub.s32 1536, 1536
          %174 = vsyncadd [#allocation6], %s173
          %s175 = sshll.u32 [#allocation5], 4
          %s176 = int_to_ptr.vmem [resolvable:$true] %s175
          %181 = dma.hbm_to_vmem [thread:$0]  %s1, 1536, %s176, [#allocation6], 192, 192, 12
        $region16: #{tpu_custom_call.1} parent=11 // pred_fallthru
          _
        // Predicated region
        $region17: #{tpu_custom_call.1} parent=11 // pred_check
          %p182 = pneg %p86
        $region18: #{tpu_custom_call.1} parent=11 // pred_check_branch
          %184 = sbr.rel (%p182) target = $region20
        $region19: #{tpu_custom_call.1} parent=11 // pred_region
          _
        $region20: #{tpu_custom_call.1} parent=11 // pred_fallthru
          _
        // Predicated region
        $region21: #{tpu_custom_call.1} parent=11 // pred_check
          %p185 = pneg %p107
        $region22: #{tpu_custom_call.1} parent=11 // pred_check_branch
          %187 = sbr.rel (%p185) target = $region24
        $region23: #{tpu_custom_call.1} parent=11 // pred_region
          %s189 = ssub.s32 1024, 1024
          %190 = vsyncadd [#allocation6], %s189
          %s191 = sshll.u32 [#allocation7], 4
          %s192 = int_to_ptr.vmem [resolvable:$true] %s191
          %197 = dma.hbm_to_vmem [thread:$0]  %s3, 1024, %s192, [#allocation6], 64, 64, 4
        $region24: #{tpu_custom_call.1} parent=11 // pred_fallthru
          _
        // Predicated region
        $region25: #{tpu_custom_call.1} parent=11 // pred_check
          %p198 = pneg %p128
        $region26: #{tpu_custom_call.1} parent=11 // pred_check_branch
          %200 = sbr.rel (%p198) target = $region28
        $region27: #{tpu_custom_call.1} parent=11 // pred_region
          _
        $region28: #{tpu_custom_call.1} parent=11 // pred_fallthru
          _
      $region12: #{tpu_custom_call.1} parent=5 // pred_fallthru
        _
      %p201 = scmp.lt.s32.totalorder %s18, 2
      // Predicated region
      $region29: #{tpu_custom_call.1} parent=5 // pred_check
        %p202 = pneg %p201
      $region30: #{tpu_custom_call.1} parent=5 // pred_check_branch
        %204 = sbr.rel (%p202) target = $region32
      $region31: #{tpu_custom_call.1} parent=5 // pred_region
        // Predicated region
        $region33: #{tpu_custom_call.1} parent=31 // pred_check
          %p205 = pneg %p38
        $region34: #{tpu_custom_call.1} parent=31 // pred_check_branch
          %207 = sbr.rel (%p205) target = $region36
        $region35: #{tpu_custom_call.1} parent=31 // pred_region
          %s208 = sand.u32 %s28, 1
          %s209 = scalar_lea.sflag [#allocation3], %s208
          %s210 = sand.u32 %s28, 1
          %s211 = smul.addr %s210, 8
          %s212 = scalar_lea.vmem [#allocation2], %s211
          %s214 = ssub.s32 128, 128
          %215 = vsyncadd %s209, %s214
          %s216 = smul.addr %s18, 128
          %s217 = scalar_lea.hbm %s0, %s216
          %s219 = sshll.u32 %s212, 4
          %s220 = int_to_ptr.vmem [resolvable:$true] %s219
          %222 = dma.hbm_to_vmem [thread:$0]  %s217, 128, %s220, %s209
        $region36: #{tpu_custom_call.1} parent=31 // pred_fallthru
          _
      $region32: #{tpu_custom_call.1} parent=5 // pred_fallthru
        _
      %p223 = scmp.le.s32.totalorder 1, %s18
      %p224 = scmp.lt.s32.totalorder %s18, 3
      %p225 = pnand %p223, %p224
      %p226 = pneg %p225
      // Predicated region
      $region37: #{tpu_custom_call.1} parent=5 // pred_check
        _
      $region38: #{tpu_custom_call.1} parent=5 // pred_check_branch
        %228 = sbr.rel (%p225) target = $region40
      $region39: #{tpu_custom_call.1} parent=5 // pred_region
        %s229 = ssub.s32 %s18, 1
        %s230 = sand.u32 %s31, 1
        %s231 = scalar_lea.sflag [#allocation3], %s230
        %s232 = sand.u32 %s31, 1
        %s233 = smul.addr %s232, 8
        %s234 = scalar_lea.vmem [#allocation2], %s233
        // Predicated region
        $region41: #{tpu_custom_call.1} parent=39 // pred_check
          %p235 = pneg %p44
        $region42: #{tpu_custom_call.1} parent=39 // pred_check_branch
          %237 = sbr.rel (%p235) target = $region44
        $region43: #{tpu_custom_call.1} parent=39 // pred_region
          %238 = dma.done %s231, 128
        $region44: #{tpu_custom_call.1} parent=39 // pred_fallthru
          _
        // Predicated region
        $region45: #{tpu_custom_call.1} parent=39 // pred_check
          %p239 = pneg %p65
        $region46: #{tpu_custom_call.1} parent=39 // pred_check_branch
          %241 = sbr.rel (%p239) target = $region48
        $region47: #{tpu_custom_call.1} parent=39 // pred_region
          %242 = dma.done [#allocation6], 1536
        $region48: #{tpu_custom_call.1} parent=39 // pred_fallthru
          _
        // Predicated region
        $region49: #{tpu_custom_call.1} parent=39 // pred_check
          %p243 = pneg %p107
        $region50: #{tpu_custom_call.1} parent=39 // pred_check_branch
          %245 = sbr.rel (%p243) target = $region52
        $region51: #{tpu_custom_call.1} parent=39 // pred_region
          %246 = dma.done [#allocation6], 1024
        $region52: #{tpu_custom_call.1} parent=39 // pred_fallthru
          _
        %s247 = sand.u32 %s31, 1
        %s248 = scalar_lea.sflag [#allocation3], %s247
        %s249 = sand.u32 %s31, 1
        %s250 = smul.addr %s249, 8
        %s251 = scalar_lea.vmem [#allocation2], %s250
        %p252 = pneg %p44
        %p253 = pneg %p41
        %p254 = pneg %p65
        %p255 = pneg %p62
        %p256 = pneg %p86
        %p257 = pneg %p83
        %p258 = pneg %p107
        %p259 = pneg %p104
        %p260 = pneg %p128
        %p261 = pneg %p125
        %p262 = pneg %p154
        %p263 = pneg %p151
        %s264 = sand.u32 %s141, 1
        %s265 = scalar_lea.sflag [#allocation4], %s264
        %s266 = sand.u32 %s141, 1
        %s267 = smul.addr %s266, 8
        %s268 = scalar_lea.vmem [#allocation8], %s267
        %v270 = vld [vmem:[%s234] sm:$0xff]
        %v271 = vpack.c.bf16 %v270, %v270
        %v272 = vld [vmem:[#allocation5] sm:$0xff]
        %v273 = vld [vmem:[#allocation5 + $0x8] sm:$0xf]
        %v274 = vld [vmem:[#allocation5 + $0xc] sm:$0xff]
        %v275 = vld [vmem:[#allocation5 + $0x14] sm:$0xf]
        %v276 = vld [vmem:[#allocation5 + $0x18] sm:$0xff]
        %v277 = vld [vmem:[#allocation5 + $0x20] sm:$0xf]
        %v278 = vld [vmem:[#allocation5 + $0x24] sm:$0xff]
        %v279 = vld [vmem:[#allocation5 + $0x2c] sm:$0xf]
        %v280 = vld [vmem:[#allocation5 + $0x30] sm:$0xff]
        %v281 = vld [vmem:[#allocation5 + $0x38] sm:$0xf]
        %v282 = vld [vmem:[#allocation5 + $0x3c] sm:$0xff]
        %v283 = vld [vmem:[#allocation5 + $0x44] sm:$0xf]
        %v284 = vld [vmem:[#allocation5 + $0x48] sm:$0xff]
        %v285 = vld [vmem:[#allocation5 + $0x50] sm:$0xf]
        %v286 = vld [vmem:[#allocation5 + $0x54] sm:$0xff]
        %v287 = vld [vmem:[#allocation5 + $0x5c] sm:$0xf]
        %v288 = vld [vmem:[%s2] sm:$0x7]
        %v290 = vlaneseq
        %v291 = vshrl.u32 %v290, 7
        %v292 = vsub.s32 0, %v291
        %v293 = vrot.slane %v288, %v292
        %v294 = vlaneseq
        %v295 = vshrl.u32 %v294, 7
        %v296 = vsub.s32 1, %v295
        %v297 = vrot.slane %v288, %v296
        %v298 = vlaneseq
        %v299 = vshrl.u32 %v298, 7
        %v300 = vsub.s32 2, %v299
        %v301 = vrot.slane %v288, %v300
        %v321 = vunpack.c.l.b16 %v272
        %v322 = vunpack.c.h.b16 %v272
        %v323 = vunpack.c.l.b16 %v273
        %v324 = vunpack.c.l.b16 %v274
        %v325 = vunpack.c.h.b16 %v274
        %v326 = vunpack.c.l.b16 %v275
        %v327 = vunpack.c.l.b16 %v276
        %v328 = vunpack.c.h.b16 %v276
        %v329 = vunpack.c.l.b16 %v277
        %v330 = vunpack.c.l.b16 %v278
        %v331 = vunpack.c.h.b16 %v278
        %v332 = vunpack.c.l.b16 %v279
        %v333 = vunpack.c.l.b16 %v280
        %v334 = vunpack.c.h.b16 %v280
        %v335 = vunpack.c.l.b16 %v281
        %v336 = vunpack.c.l.b16 %v282
        %v337 = vunpack.c.h.b16 %v282
        %v338 = vunpack.c.l.b16 %v283
        %v339 = vunpack.c.l.b16 %v284
        %v340 = vunpack.c.h.b16 %v284
        %v341 = vunpack.c.l.b16 %v285
        %v342 = vunpack.c.l.b16 %v286
        %v343 = vunpack.c.h.b16 %v286
        %v344 = vunpack.c.l.b16 %v287
        %v345 = vpack.c.b16 %v324, %v321
        %v346 = vpack.c.b16 %v325, %v322
        %v347 = vpack.c.b16 %v326, %v323
        %v348 = vpack.c.b16 %v330, %v327
        %v349 = vpack.c.b16 %v331, %v328
        %v350 = vpack.c.b16 %v332, %v329
        %v351 = vpack.c.b16 %v336, %v333
        %v352 = vpack.c.b16 %v337, %v334
        %v353 = vpack.c.b16 %v338, %v335
        %v354 = vpack.c.b16 %v342, %v339
        %v355 = vpack.c.b16 %v343, %v340
        %v356 = vpack.c.b16 %v344, %v341
        %vm369 = vcmask 523264
        %v371 = vsel %vm369, %v271, 0
        %373 = vmatprep.subr.bf16.mxu0 %v346
        %374 = vmatpush1.bf16.msra.mxu0 %v345
        %375 = vmatprep.subr.bf16.mxu0 %v349
        %376 = vmatpush1.bf16.msra.mxu0 %v348
        %377 = vmatprep.subr.bf16.mxu0 %v352
        %378 = vmatpush1.bf16.msra.mxu0 %v351
        %379 = vmatprep.subr.bf16.mxu0 %v355
        %380 = vmatpush1.bf16.msra.mxu0 %v354
        %381 = vmatprep.subr.bf16.mxu0 0
        %382 = vmatpush1.bf16.msra.mxu0 0
        %383 = vmatprep.subr.bf16.mxu0 0
        %384 = vmatpush1.bf16.msra.mxu0 0
        %385 = vmatprep.subr.bf16.mxu0 0
        %386 = vmatpush1.bf16.msra.mxu0 0
        %387 = vmatprep.subr.bf16.mxu0 0
        %388 = vmatpush1.bf16.msra.mxu0 0
        %389 = vmatprep.subr.bf16.mxu0 0
        %390 = vmatpush1.bf16.msra.mxu0 0
        %391 = vmatprep.subr.bf16.mxu0 0
        %392 = vmatpush1.bf16.msra.mxu0 0
        %393 = vmatprep.subr.bf16.mxu0 0
        %394 = vmatpush1.bf16.msra.mxu0 0
        %395 = vmatprep.subr.bf16.mxu0 0
        %396 = vmatpush1.bf16.msra.mxu0 0
        %397 = vmatprep.subr.bf16.mxu0 0
        %398 = vmatpush1.bf16.msra.mxu0 0
        %399 = vmatprep.subr.bf16.mxu0 0
        %400 = vmatpush1.bf16.msra.mxu0 0
        %401 = vmatprep.subr.bf16.mxu0 0
        %402 = vmatpush1.bf16.msra.mxu0 0
        %403 = vmatprep.subr.bf16.mxu0 0
        %404 = vmatpush1.bf16.msra.mxu0 0
        %405 = vmatprep.mubr.bf16.mxu0 0
        %406 = vmatmul.mubr.bf16.gmra.mrb[0].mxu0 %v371
        %v407 = vpop.f32.mrb[0].mxu0
        %v408 = vadd.f32 %v293, %v407
        %v409 = vpop.f32.mrb[0].mxu0
        %v410 = vadd.f32 %v297, %v409
        %v411 = vpop.f32.mrb[0].mxu0
        %v412 = vpop.f32.mrb[0].mxu0
        %413 = vdwg.mxu0
        %414 = vmatprep.subr.bf16.mxu0 0
        %415 = vmatpush1.bf16.msra.mxu0 %v347
        %416 = vmatprep.subr.bf16.mxu0 0
        %417 = vmatpush1.bf16.msra.mxu0 %v350
        %418 = vmatprep.subr.bf16.mxu0 0
        %419 = vmatpush1.bf16.msra.mxu0 %v353
        %420 = vmatprep.subr.bf16.mxu0 0
        %421 = vmatpush1.bf16.msra.mxu0 %v356
        %422 = vmatprep.subr.bf16.mxu0 0
        %423 = vmatpush1.bf16.msra.mxu0 0
        %424 = vmatprep.subr.bf16.mxu0 0
        %425 = vmatpush1.bf16.msra.mxu0 0
        %426 = vmatprep.subr.bf16.mxu0 0
        %427 = vmatpush1.bf16.msra.mxu0 0
        %428 = vmatprep.subr.bf16.mxu0 0
        %429 = vmatpush1.bf16.msra.mxu0 0
        %430 = vmatprep.subr.bf16.mxu0 0
        %431 = vmatpush1.bf16.msra.mxu0 0
        %432 = vmatprep.subr.bf16.mxu0 0
        %433 = vmatpush1.bf16.msra.mxu0 0
        %434 = vmatprep.subr.bf16.mxu0 0
        %435 = vmatpush1.bf16.msra.mxu0 0
        %436 = vmatprep.subr.bf16.mxu0 0
        %437 = vmatpush1.bf16.msra.mxu0 0
        %438 = vmatprep.subr.bf16.mxu0 0
        %439 = vmatpush1.bf16.msra.mxu0 0
        %440 = vmatprep.subr.bf16.mxu0 0
        %441 = vmatpush1.bf16.msra.mxu0 0
        %442 = vmatprep.subr.bf16.mxu0 0
        %443 = vmatpush1.bf16.msra.mxu0 0
        %444 = vmatprep.subr.bf16.mxu0 0
        %445 = vmatpush1.bf16.msra.mxu0 0
        %446 = vmatprep.mubr.bf16.mxu0 0
        %447 = vmatmul.mubr.bf16.gmra.mrb[0].mxu0 %v371
        %v448 = vpop.f32.mrb[0].mxu0
        %v449 = vadd.f32 %v301, %v448
        %v450 = vpop.f32.mrb[0].mxu0
        %v451 = vpop.f32.mrb[0].mxu0
        %v452 = vpop.f32.mrb[0].mxu0
        %453 = vdwg.mxu0
        %v454 = vpack.c.bf16 %v408, %v408
        %v455 = vpack.c.bf16 %v410, %v410
        %456 = vmatprep.subr.bf16.mxu0 0
        %457 = vmatpush1.bf16.xpose.msra.mxu0 %v455
        %458 = vmatprep.subr.bf16.mxu0 0
        %459 = vmatpush1.bf16.xpose.msra.mxu0 0
        %460 = vmatprep.subr.bf16.mxu0 0
        %461 = vmatpush1.bf16.xpose.msra.mxu0 0
        %462 = vmatprep.subr.bf16.mxu0 0
        %463 = vmatpush1.bf16.xpose.msra.mxu0 0
        %464 = vmatprep.subr.bf16.mxu0 0
        %465 = vmatpush1.bf16.xpose.msra.mxu0 0
        %466 = vmatprep.subr.bf16.mxu0 0
        %467 = vmatpush1.bf16.xpose.msra.mxu0 0
        %468 = vmatprep.subr.bf16.mxu0 0
        %469 = vmatpush1.bf16.xpose.msra.mxu0 0
        %470 = vmatprep.subr.bf16.mxu0 0
        %471 = vmatpush1.bf16.xpose.msra.mxu0 0
        %472 = vmatprep.subr.bf16.mxu0 0
        %473 = vmatpush1.bf16.xpose.msra.mxu0 0
        %474 = vmatprep.subr.bf16.mxu0 0
        %475 = vmatpush1.bf16.xpose.msra.mxu0 0
        %476 = vmatprep.subr.bf16.mxu0 0
        %477 = vmatpush1.bf16.xpose.msra.mxu0 0
        %478 = vmatprep.subr.bf16.mxu0 0
        %479 = vmatpush1.bf16.xpose.msra.mxu0 0
        %480 = vmatprep.subr.bf16.mxu0 0
        %481 = vmatpush1.bf16.xpose.msra.mxu0 0
        %482 = vmatprep.subr.bf16.mxu0 0
        %483 = vmatpush1.bf16.xpose.msra.mxu0 0
        %484 = vmatprep.subr.bf16.mxu0 0
        %485 = vmatpush1.bf16.xpose.msra.mxu0 0
        %486 = vmatprep.subr.bf16.mxu0 0
        %487 = vmatpush1.bf16.xpose.msra.mxu0 0
        %488 = vmatprep.mubr.bf16.mxu0 0
        %489 = vmatmul.mubr.bf16.gmra.mrb[0].mxu0 %v454
        %v490 = vpop.f32.mrb[0].mxu0
        %v491 = vadd.f32 0.0, %v490
        %v492 = vpop.f32.mrb[0].mxu0
        %v493 = vpop.f32.mrb[0].mxu0
        %v494 = vpop.f32.mrb[0].mxu0
        %495 = vdwg.mxu0
        %vm496 = vcmask 64512
        %v497 = vsel %vm496, %v491, -inf
        %498 = vmax.xlane.f32.xlu0 %v497
        %v499 = vpop.xlane.xlu0 %498
        %v500 = vsub.f32 %v491, %v499
        %v501 = vmul.f32 %v500, 1.442695
        %v502 = vpow.pop %v501
        %v503 = vsel %vm496, %v502, 0.0
        %504 = vadd.xlane.f32.xlu0 %v503
        %v505 = vpop.xlane.xlu0 %504
        %v506 = vrcp.pop %v505
        %v507 = vmul.f32 %v502, %v506
        %v508 = vpack.c.bf16 %v507, %v507
        %v509 = vpack.c.bf16 %v449, %v449
        %v511 = vsel %vm496, %v508, 0
        %vm513 = vcmask 1043456
        %v515 = vsel %vm513, %v509, 0
        %517 = vmatprep.subr.bf16.mxu0 0
        %518 = vmatpush1.bf16.msra.mxu0 %v515
        %519 = vmatprep.subr.bf16.mxu0 0
        %520 = vmatpush1.bf16.msra.mxu0 0
        %521 = vmatprep.subr.bf16.mxu0 0
        %522 = vmatpush1.bf16.msra.mxu0 0
        %523 = vmatprep.subr.bf16.mxu0 0
        %524 = vmatpush1.bf16.msra.mxu0 0
        %525 = vmatprep.subr.bf16.mxu0 0
        %526 = vmatpush1.bf16.msra.mxu0 0
        %527 = vmatprep.subr.bf16.mxu0 0
        %528 = vmatpush1.bf16.msra.mxu0 0
        %529 = vmatprep.subr.bf16.mxu0 0
        %530 = vmatpush1.bf16.msra.mxu0 0
        %531 = vmatprep.subr.bf16.mxu0 0
        %532 = vmatpush1.bf16.msra.mxu0 0
        %533 = vmatprep.subr.bf16.mxu0 0
        %534 = vmatpush1.bf16.msra.mxu0 0
        %535 = vmatprep.subr.bf16.mxu0 0
        %536 = vmatpush1.bf16.msra.mxu0 0
        %537 = vmatprep.subr.bf16.mxu0 0
        %538 = vmatpush1.bf16.msra.mxu0 0
        %539 = vmatprep.subr.bf16.mxu0 0
        %540 = vmatpush1.bf16.msra.mxu0 0
        %541 = vmatprep.subr.bf16.mxu0 0
        %542 = vmatpush1.bf16.msra.mxu0 0
        %543 = vmatprep.subr.bf16.mxu0 0
        %544 = vmatpush1.bf16.msra.mxu0 0
        %545 = vmatprep.subr.bf16.mxu0 0
        %546 = vmatpush1.bf16.msra.mxu0 0
        %547 = vmatprep.subr.bf16.mxu0 0
        %548 = vmatpush1.bf16.msra.mxu0 0
        %549 = vmatprep.mubr.bf16.mxu0 0
        %550 = vmatmul.mubr.bf16.gmra.mrb[0].mxu0 %v511
        %v551 = vpop.f32.mrb[0].mxu0
        %v552 = vadd.f32 0.0, %v551
        %v553 = vpop.f32.mrb[0].mxu0
        %v554 = vpop.f32.mrb[0].mxu0
        %v555 = vpop.f32.mrb[0].mxu0
        %556 = vdwg.mxu0
        %v557 = vld [vmem:[#allocation7] sm:$0xf]
        %v558 = vld [vmem:[#allocation7 + $0x4] sm:$0xf]
        %v559 = vld [vmem:[#allocation7 + $0x8] sm:$0xf]
        %v560 = vld [vmem:[#allocation7 + $0xc] sm:$0xf]
        %v561 = vld [vmem:[#allocation7 + $0x10] sm:$0xf]
        %v562 = vld [vmem:[#allocation7 + $0x14] sm:$0xf]
        %v563 = vld [vmem:[#allocation7 + $0x18] sm:$0xf]
        %v564 = vld [vmem:[#allocation7 + $0x1c] sm:$0xf]
        %v565 = vld [vmem:[#allocation7 + $0x20] sm:$0xf]
        %v566 = vld [vmem:[#allocation7 + $0x24] sm:$0xf]
        %v567 = vld [vmem:[#allocation7 + $0x28] sm:$0xf]
        %v568 = vld [vmem:[#allocation7 + $0x2c] sm:$0xf]
        %v569 = vld [vmem:[#allocation7 + $0x30] sm:$0xf]
        %v570 = vld [vmem:[#allocation7 + $0x34] sm:$0xf]
        %v571 = vld [vmem:[#allocation7 + $0x38] sm:$0xf]
        %v572 = vld [vmem:[#allocation7 + $0x3c] sm:$0xf]
        %v573 = vpack.c.bf16 %v552, %v552
        %v574 = vld [vmem:[%s4] sm:$0x1]
        %v576 = vlaneseq
        %v577 = vshrl.u32 %v576, 7
        %v578 = vsub.s32 0, %v577
        %v579 = vrot.slane %v574, %v578
        %v597 = vunpack.c.l.b16 %v557
        %v598 = vunpack.c.l.b16 %v558
        %v599 = vunpack.c.l.b16 %v559
        %v600 = vunpack.c.l.b16 %v560
        %v601 = vunpack.c.l.b16 %v561
        %v602 = vunpack.c.l.b16 %v562
        %v603 = vunpack.c.l.b16 %v563
        %v604 = vunpack.c.l.b16 %v564
        %v605 = vunpack.c.l.b16 %v565
        %v606 = vunpack.c.l.b16 %v566
        %v607 = vunpack.c.l.b16 %v567
        %v608 = vunpack.c.l.b16 %v568
        %v609 = vunpack.c.l.b16 %v569
        %v610 = vunpack.c.l.b16 %v570
        %v611 = vunpack.c.l.b16 %v571
        %v612 = vunpack.c.l.b16 %v572
        %v613 = vpack.c.b16 %v598, %v597
        %v614 = vpack.c.b16 %v600, %v599
        %v615 = vpack.c.b16 %v602, %v601
        %v616 = vpack.c.b16 %v604, %v603
        %v617 = vpack.c.b16 %v606, %v605
        %v618 = vpack.c.b16 %v608, %v607
        %v619 = vpack.c.b16 %v610, %v609
        %v620 = vpack.c.b16 %v612, %v611
        %629 = vmatprep.subr.bf16.mxu0 0
        %630 = vmatpush1.bf16.msra.mxu0 %v613
        %631 = vmatprep.subr.bf16.mxu0 0
        %632 = vmatpush1.bf16.msra.mxu0 %v614
        %633 = vmatprep.subr.bf16.mxu0 0
        %634 = vmatpush1.bf16.msra.mxu0 %v615
        %635 = vmatprep.subr.bf16.mxu0 0
        %636 = vmatpush1.bf16.msra.mxu0 %v616
        %637 = vmatprep.subr.bf16.mxu0 0
        %638 = vmatpush1.bf16.msra.mxu0 %v617
        %639 = vmatprep.subr.bf16.mxu0 0
        %640 = vmatpush1.bf16.msra.mxu0 %v618
        %641 = vmatprep.subr.bf16.mxu0 0
        %642 = vmatpush1.bf16.msra.mxu0 %v619
        %643 = vmatprep.subr.bf16.mxu0 0
        %644 = vmatpush1.bf16.msra.mxu0 %v620
        %645 = vmatprep.subr.bf16.mxu0 0
        %646 = vmatpush1.bf16.msra.mxu0 0
        %647 = vmatprep.subr.bf16.mxu0 0
        %648 = vmatpush1.bf16.msra.mxu0 0
        %649 = vmatprep.subr.bf16.mxu0 0
        %650 = vmatpush1.bf16.msra.mxu0 0
        %651 = vmatprep.subr.bf16.mxu0 0
        %652 = vmatpush1.bf16.msra.mxu0 0
        %653 = vmatprep.subr.bf16.mxu0 0
        %654 = vmatpush1.bf16.msra.mxu0 0
        %655 = vmatprep.subr.bf16.mxu0 0
        %656 = vmatpush1.bf16.msra.mxu0 0
        %657 = vmatprep.subr.bf16.mxu0 0
        %658 = vmatpush1.bf16.msra.mxu0 0
        %659 = vmatprep.subr.bf16.mxu0 0
        %660 = vmatpush1.bf16.msra.mxu0 0
        %661 = vmatprep.mubr.bf16.mxu0 0
        %662 = vmatmul.mubr.bf16.gmra.mrb[0].mxu0 %v573
        %v663 = vpop.f32.mrb[0].mxu0
        %v664 = vadd.f32 %v579, %v663
        %v665 = vpop.f32.mrb[0].mxu0
        %v666 = vpop.f32.mrb[0].mxu0
        %v667 = vpop.f32.mrb[0].mxu0
        %668 = vdwg.mxu0
        %669 = vst [vmem:[%s268] sm:$0xff] %v664
        %s670 = sand.u32 %s141, 1
        %s671 = scalar_lea.sflag [#allocation4], %s670
        %s672 = sand.u32 %s141, 1
        %s673 = smul.addr %s672, 8
        %s674 = scalar_lea.vmem [#allocation8], %s673
        // Predicated region
        $region53: #{tpu_custom_call.1} parent=39 // pred_check
          %p675 = pneg %p151
        $region54: #{tpu_custom_call.1} parent=39 // pred_check_branch
          %677 = sbr.rel (%p675) target = $region56
        $region55: #{tpu_custom_call.1} parent=39 // pred_region
          %s679 = ssub.s32 128, 128
          %680 = vsyncadd %s671, %s679
          %s681 = smul.addr %s23, 128
          %s682 = scalar_lea.hbm %s5, %s681
          %s684 = sshll.u32 %s674, 4
          %s685 = int_to_ptr.vmem [resolvable:$true] %s684
          %687 = dma.vmem_to_hbm [thread:$0]  %s685, 128, %s682, %s671
        $region56: #{tpu_custom_call.1} parent=39 // pred_fallthru
          _
      $region40: #{tpu_custom_call.1} parent=5 // pred_fallthru
        _
      %p688 = scmp.le.s32.totalorder 2, %s18
      // Predicated region
      $region57: #{tpu_custom_call.1} parent=5 // pred_check
        %p689 = pneg %p688
      $region58: #{tpu_custom_call.1} parent=5 // pred_check_branch
        %691 = sbr.rel (%p689) target = $region60
      $region59: #{tpu_custom_call.1} parent=5 // pred_region
        %s692 = ssub.s32 %s18, 2
        // Predicated region
        $region61: #{tpu_custom_call.1} parent=59 // pred_check
          %p693 = pneg %p157
        $region62: #{tpu_custom_call.1} parent=59 // pred_check_branch
          %695 = sbr.rel (%p693) target = $region64
        $region63: #{tpu_custom_call.1} parent=59 // pred_region
          %s696 = sand.u32 %s142, 1
          %s697 = scalar_lea.sflag [#allocation4], %s696
          %s698 = sand.u32 %s142, 1
          %s699 = smul.addr %s698, 8
          %s700 = scalar_lea.vmem [#allocation8], %s699
          %701 = dma.done %s697, 128
        $region64: #{tpu_custom_call.1} parent=59 // pred_fallthru
          _
      $region60: #{tpu_custom_call.1} parent=5 // pred_fallthru
        _
    $region6: #{tpu_custom_call.1} parent=1 // loop_footer
      %s22 = sadd.s32 1, %s18
    $region7: #{tpu_custom_call.1} parent=1 // loop_footer_branch
      %17 = sbr.rel target = $region3
    $region8: #{tpu_custom_call.1} parent=1 // loop_exit
      _
    %702 = vsyncpa [#allocation3], 1
    %s703 = scalar_lea.sflag [#allocation3], 1
    %704 = vsyncpa %s703, 1
    %705 = vsyncpa [#allocation6], 1
    %706 = vsyncpa [#allocation4], 1
    %s707 = scalar_lea.sflag [#allocation4], 1
    %708 = vsyncpa %s707, 1

</llo_original>
